<compile_context>
chip_gen: v7x
topology: tpu7x:2x2x1
jax: 0.10.0
libtpu: 0.0.40
codegen_flags: <defaults>
</compile_context>

<pallas_src>
import jax
import jax.numpy as jnp
from jax.experimental import pallas as pl
from jax.experimental.pallas import tpu as pltpu


def _round_up(x: int, m: int) -> int:
    return (x + m - 1) // m * m


def _vmem_capacity_bytes() -> int:
    """Per-TensorCore VMEM capacity; conservative v7x fallback if unqueryable."""
    try:
        info = pltpu.get_tpu_info()
        cap = int(getattr(info, "vmem_capacity_bytes", 0))
        if cap > 0:
            return cap
    except Exception:
        pass
    return 64 * 1024 * 1024


def mlp_kernel(x_ref, w1_ref, b1_ref, w2_ref, b2_ref, out_ref, acc_ref):
    k = pl.program_id(1)

    @pl.when(k == 0)
    def _init():
        acc_ref[...] = jnp.zeros_like(acc_ref)

    # hidden chunk = relu(x @ w1[:, k-chunk] + b1[k-chunk]); relu is elementwise
    # over the hidden dim, so per-chunk computation is exact.
    x = x_ref[...].astype(w1_ref.dtype)          # in-kernel cast (no HBM copy of x)
    h = jnp.dot(x, w1_ref[...], preferred_element_type=jnp.float32)
    h = jnp.maximum(h + b1_ref[...], 0.0)        # (TM, TK) + (1, TK)
    h = h.astype(w2_ref.dtype)                   # bf16 for the second MXU pass

    # Accumulate this hidden chunk's contribution to the second matmul.
    acc_ref[...] += jnp.dot(h, w2_ref[...], preferred_element_type=jnp.float32)

    @pl.when(k == pl.num_programs(1) - 1)
    def _finalize():
        out_ref[...] = jnp.maximum(acc_ref[...] + b2_ref[...], 0.0).astype(out_ref.dtype)


def _pick_tiles(B, in_dim, hid_p, out_p, cbytes, budget, tm_cap):
    """Pick (TM, TK): TM a multiple of 128 (capped by round_up(B,128) and the
    generation cap), TK a 128-multiple divisor of hid_p. VMEM accounting counts
    the default 2x double-buffering of every input/output block."""

    def fits(tm, tk):
        use = (2 * tm * in_dim * 4            # x blocks (f32, double-buffered)
               + 2 * in_dim * tk * cbytes     # w1 blocks (double-buffered)
               + 2 * tk * 4                   # b1 blocks (f32)
               + 2 * tk * out_p * cbytes      # w2 blocks
               + 2 * out_p * 4                # b2 blocks (f32)
               + 2 * tm * out_p * 4           # out blocks (f32)
               + tm * out_p * 4               # f32 accumulator scratch
               + tm * tk * (4 + cbytes))      # hidden f32 + bf16 temporaries
        return use <= budget

    tk_cands = sorted({c for c in (hid_p, 4096, 2048, 1024, 512, 256, 128)
                       if c <= hid_p and hid_p % c == 0}, reverse=True)
    tm = max(128, min(tm_cap, _round_up(B, 128)))   # bound batch-padding waste
    while tm >= 128:
        for tk in tk_cands:
            if fits(tm, tk):
                return tm, tk
        tm -= 128
    # Pathological shapes (e.g. huge out_dim) won't fit even at (128,128).
    # TODO(synk): add an out_dim tile for that case instead of relying on the limit.
    return 128, 128


def prepare_mlp_params(w1, b1, w2, b2, *, compute_dtype=jnp.bfloat16):
    """One-time weight prep: pad hidden/out dims to lane-dense 128 multiples and
    cast weights to the MXU compute dtype (biases stay f32, added to the f32
    accumulator). Done once, outside the per-call path."""
    in_dim, hidden_dim = w1.shape
    out_dim = w2.shape[1]
    hid_p = _round_up(hidden_dim, 128)
    out_p = _round_up(out_dim, 128)

    w1p = jnp.zeros((in_dim, hid_p), compute_dtype).at[:, :hidden_dim].set(
        w1.astype(compute_dtype))
    b1p = jnp.zeros((1, hid_p), jnp.float32).at[:, :hidden_dim].set(
        b1.reshape(1, -1).astype(jnp.float32))
    w2p = jnp.zeros((hid_p, out_p), compute_dtype).at[:hidden_dim, :out_dim].set(
        w2.astype(compute_dtype))
    b2p = jnp.zeros((1, out_p), jnp.float32).at[:, :out_dim].set(
        b2.reshape(1, -1).astype(jnp.float32))

    return dict(w1=w1p, b1=b1p, w2=w2p, b2=b2p,
                in_dim=in_dim, hidden_dim=hidden_dim, out_dim=out_dim,
                hid_p=hid_p, out_p=out_p, compute_dtype=compute_dtype)


def mlp_forward(x, params):
    """x: (B, in_dim) f32. Returns (B, out_dim) f32 = relu(fc2(relu(fc1(x))))."""
    in_dim, out_dim = params["in_dim"], params["out_dim"]
    hid_p, out_p = params["hid_p"], params["out_p"]
    cdt = params["compute_dtype"]
    cbytes = jnp.dtype(cdt).itemsize
    B = x.shape[0]
    assert x.shape[1] == in_dim

    # Generation-aware VMEM sizing (v7x: 64 MiB -> budget 48 / limit 56;
    # v5e/v6e: 128 MiB -> budget 96 / limit 112).
    cap = _vmem_capacity_bytes()
    budget = cap * 3 // 4
    vmem_limit = cap * 7 // 8
    tm_cap = 1024 if cap >= 100 * 1024 * 1024 else 512
    tm, tk = _pick_tiles(B, in_dim, hid_p, out_p, cbytes, budget, tm_cap)

    # x stays f32 (cast in-kernel); only the batch dim is zero-padded, and only
    # when needed -> no extra HBM pass over the activations in the common case.
    b_p = _round_up(B, tm)
    xp = x if b_p == B else jnp.pad(x, ((0, b_p - B), (0, 0)))

    grid = (b_p // tm, hid_p // tk)
    # NOTE(v7x): a single batch tile leaves one TensorCore idle; for latency-
    # critical large-B cases prefer an even number of batch tiles.

    flops = 2 * b_p * (in_dim * hid_p + hid_p * out_p)
    bytes_accessed = (b_p * in_dim * 4
                      + grid[0] * (in_dim * hid_p + hid_p * out_p) * cbytes
                      + (hid_p + out_p) * 4
                      + b_p * out_p * 4)

    out_padded = pl.pallas_call(
        mlp_kernel,
        out_shape=jax.ShapeDtypeStruct((b_p, out_p), x.dtype),
        grid_spec=pltpu.PrefetchScalarGridSpec(
            num_scalar_prefetch=0,
            grid=grid,
            in_specs=[
                # x: batch-tiled, full-extent along in_dim, constant over k.
                pl.BlockSpec((tm, in_dim), lambda i, k: (i, 0)),
                # w1 / b1: hidden-chunked along k.
                pl.BlockSpec((in_dim, tk), lambda i, k: (0, k)),
                pl.BlockSpec((1, tk), lambda i, k: (0, k)),
                # w2: hidden-chunked along k; b2: fully resident.
                pl.BlockSpec((tk, out_p), lambda i, k: (k, 0)),
                pl.BlockSpec((1, out_p), lambda i, k: (0, 0)),
            ],
            # Output block constant over k -> stays resident across the
            # reduction axis (accumulator pattern, written on the last k step).
            out_specs=pl.BlockSpec((tm, out_p), lambda i, k: (i, 0)),
            scratch_shapes=[pltpu.VMEM((tm, out_p), jnp.float32)],
        ),
        compiler_params=pltpu.CompilerParams(
            dimension_semantics=("parallel", "arbitrary"),
            vmem_limit_bytes=vmem_limit,
        ),
        cost_estimate=pl.CostEstimate(
            flops=flops, transcendentals=0, bytes_accessed=bytes_accessed),
    )(xp, params["w1"], params["b1"], params["w2"], params["b2"])

    return out_padded[:B, :out_dim]


if __name__ == "__main__":
    # Small shapes consistent with MLP_torch(in_dim, hidden_dim, out_dim).
    batch, in_dim, hidden_dim, out_dim = 8, 16, 32, 8

    key = jax.random.PRNGKey(0)
    kx, k1, kb1, k2, kb2 = jax.random.split(key, 5)

    x = jax.random.normal(kx, (batch, in_dim), dtype=jnp.float32)
    w1 = jax.random.normal(k1, (in_dim, hidden_dim), dtype=jnp.float32) * 0.1
    b1 = jax.random.normal(kb1, (hidden_dim,), dtype=jnp.float32) * 0.1
    w2 = jax.random.normal(k2, (hidden_dim, out_dim), dtype=jnp.float32) * 0.1
    b2 = jax.random.normal(kb2, (out_dim,), dtype=jnp.float32) * 0.1

    params = prepare_mlp_params(w1, b1, w2, b2)   # one-time pad/cast of weights
    out = mlp_forward(x, params)
    out = jax.block_until_ready(out)

    # Pure-JAX f32 reference (same semantics as the torch forward). The kernel
    # uses bf16 operands with f32 accumulation, so compare with a loose tol.
    ref = jnp.maximum(jnp.maximum(x @ w1 + b1[None, :], 0.0) @ w2 + b2[None, :], 0.0)
    assert out.shape == (batch, out_dim)
    assert jnp.allclose(out, ref, atol=5e-2, rtol=5e-2), (
        f"max abs err {jnp.max(jnp.abs(out - ref))}")

    print("KERNEL_OK")
</pallas_src>

<mosaic_0001>
module attributes {stable_mosaic.version = 11 : i64} {
  func.func @mlp_kernel(%arg0: i32, %arg1: i32, %arg2: memref<128x16xf32, #tpu.memory_space<vmem>>, %arg3: memref<16x128xbf16, #tpu.memory_space<vmem>>, %arg4: memref<1x128xf32, #tpu.memory_space<vmem>>, %arg5: memref<128x128xbf16, #tpu.memory_space<vmem>>, %arg6: memref<1x128xf32, #tpu.memory_space<vmem>>, %arg7: memref<128x128xf32, #tpu.memory_space<vmem>>, %arg8: memref<128x128xf32, #tpu.memory_space<vmem>>) attributes {dimension_semantics = [#tpu.dimension_semantics<parallel>, #tpu.dimension_semantics<arbitrary>], iteration_bounds = array<i64: 1, 1>, scalar_prefetch = 0 : i64, scratch_operands = 1 : i64, tpu.core_type = #tpu.core_type<tc>, window_params = [{transform_indices = @transform_0, window_bounds = array<i64: 128, 16>}, {transform_indices = @transform_1, window_bounds = array<i64: 16, 128>}, {transform_indices = @transform_2, window_bounds = array<i64: 1, 128>}, {transform_indices = @transform_3, window_bounds = array<i64: 128, 128>}, {pipeline_mode = #tpu.pipeline_mode<synchronous>, transform_indices = @transform_4, window_bounds = array<i64: 1, 128>}, {transform_indices = @transform_5, window_bounds = array<i64: 128, 128>}]} {
    %c0_i32 = arith.constant 0 : i32
    %0 = arith.cmpi eq, %arg1, %c0_i32 : i32
    %1 = arith.extui %0 : i1 to i32
    %c0_i32_0 = arith.constant 0 : i32
    %2 = arith.cmpi ne, %1, %c0_i32_0 : i32
    scf.if %2 {
      %cst_16 = arith.constant 0.000000e+00 : f32
      %21 = vector.broadcast %cst_16 : f32 to vector<128x128xf32>
      %c0_17 = arith.constant 0 : index
      %c0_18 = arith.constant 0 : index
      %22 = vector.load %arg8[%c0_17, %c0_18] : memref<128x128xf32, #tpu.memory_space<vmem>>, vector<128x128xf32>
      tpu.vector_store %arg8[%c0_17, %c0_18], %21 {strides = array<i32>} : memref<128x128xf32, #tpu.memory_space<vmem>>, vector<128x128xf32>,
    } else {
    }
    %c0 = arith.constant 0 : index
    %c0_1 = arith.constant 0 : index
    %3 = vector.load %arg2[%c0, %c0_1] : memref<128x16xf32, #tpu.memory_space<vmem>>, vector<128x16xf32>
    %4 = arith.truncf %3 : vector<128x16xf32> to vector<128x16xbf16>
    %c0_2 = arith.constant 0 : index
    %c0_3 = arith.constant 0 : index
    %5 = vector.load %arg3[%c0_2, %c0_3] : memref<16x128xbf16, #tpu.memory_space<vmem>>, vector<16x128xbf16>
    %cst = arith.constant dense<0.000000e+00> : vector<128x128xf32>
    %6 = tpu.matmul %4, %5, %cst {dimension_numbers = #tpu.dot_dimension_numbers<[1], [0], [0], [1], [0, 0, 1, 1], [], []>} : vector<128x16xbf16>, vector<16x128xbf16>, vector<128x128xf32> -> vector<128x128xf32>
    %c0_4 = arith.constant 0 : index
    %c0_5 = arith.constant 0 : index
    %7 = vector.load %arg4[%c0_4, %c0_5] : memref<1x128xf32, #tpu.memory_space<vmem>>, vector<1x128xf32>
    %8 = vector.broadcast %7 : vector<1x128xf32> to vector<128x128xf32>
    %9 = arith.addf %6, %8 : vector<128x128xf32>
    %cst_6 = arith.constant 0.000000e+00 : f32
    %10 = vector.broadcast %cst_6 : f32 to vector<128x128xf32>
    %11 = arith.maximumf %9, %10 : vector<128x128xf32>
    %12 = arith.truncf %11 : vector<128x128xf32> to vector<128x128xbf16>
    %c0_7 = arith.constant 0 : index
    %c0_8 = arith.constant 0 : index
    %13 = vector.load %arg8[%c0_7, %c0_8] : memref<128x128xf32, #tpu.memory_space<vmem>>, vector<128x128xf32>
    %c0_9 = arith.constant 0 : index
    %c0_10 = arith.constant 0 : index
    %14 = vector.load %arg5[%c0_9, %c0_10] : memref<128x128xbf16, #tpu.memory_space<vmem>>, vector<128x128xbf16>
    %cst_11 = arith.constant dense<0.000000e+00> : vector<128x128xf32>
    %15 = tpu.matmul %12, %14, %cst_11 {dimension_numbers = #tpu.dot_dimension_numbers<[1], [0], [0], [1], [0, 0, 1, 1], [], []>} : vector<128x128xbf16>, vector<128x128xbf16>, vector<128x128xf32> -> vector<128x128xf32>
    %16 = arith.addf %13, %15 : vector<128x128xf32>
    %c0_12 = arith.constant 0 : index
    %c0_13 = arith.constant 0 : index
    %17 = vector.load %arg8[%c0_12, %c0_13] : memref<128x128xf32, #tpu.memory_space<vmem>>, vector<128x128xf32>
    tpu.vector_store %arg8[%c0_12, %c0_13], %16 {strides = array<i32>} : memref<128x128xf32, #tpu.memory_space<vmem>>, vector<128x128xf32>,
    %c0_i32_14 = arith.constant 0 : i32
    %18 = arith.cmpi eq, %arg1, %c0_i32_14 : i32
    %19 = arith.extui %18 : i1 to i32
    %c0_i32_15 = arith.constant 0 : i32
    %20 = arith.cmpi ne, %19, %c0_i32_15 : i32
    scf.if %20 {
      %c0_16 = arith.constant 0 : index
      %c0_17 = arith.constant 0 : index
      %21 = vector.load %arg8[%c0_16, %c0_17] : memref<128x128xf32, #tpu.memory_space<vmem>>, vector<128x128xf32>
      %c0_18 = arith.constant 0 : index
      %c0_19 = arith.constant 0 : index
      %22 = vector.load %arg6[%c0_18, %c0_19] : memref<1x128xf32, #tpu.memory_space<vmem>>, vector<1x128xf32>
      %23 = vector.broadcast %22 : vector<1x128xf32> to vector<128x128xf32>
      %24 = arith.addf %21, %23 : vector<128x128xf32>
      %cst_20 = arith.constant 0.000000e+00 : f32
      %25 = vector.broadcast %cst_20 : f32 to vector<128x128xf32>
      %26 = arith.maximumf %24, %25 : vector<128x128xf32>
      %c0_21 = arith.constant 0 : index
      %c0_22 = arith.constant 0 : index
      %27 = vector.load %arg7[%c0_21, %c0_22] : memref<128x128xf32, #tpu.memory_space<vmem>>, vector<128x128xf32>
      tpu.vector_store %arg7[%c0_21, %c0_22], %26 {strides = array<i32>} : memref<128x128xf32, #tpu.memory_space<vmem>>, vector<128x128xf32>,
    } else {
    }
    return
  }
  func.func @transform_0(%arg0: i32, %arg1: i32) -> (i32, i32) {
    %c0_i32 = arith.constant 0 : i32
    %c0_i32_0 = arith.constant 0 : i32
    return %arg0, %c0_i32 : i32, i32
  }
  func.func @transform_1(%arg0: i32, %arg1: i32) -> (i32, i32) {
    %c0_i32 = arith.constant 0 : i32
    %c0_i32_0 = arith.constant 0 : i32
    return %c0_i32, %arg1 : i32, i32
  }
  func.func @transform_2(%arg0: i32, %arg1: i32) -> (i32, i32) {
    %c0_i32 = arith.constant 0 : i32
    %c0_i32_0 = arith.constant 0 : i32
    return %c0_i32, %arg1 : i32, i32
  }
  func.func @transform_3(%arg0: i32, %arg1: i32) -> (i32, i32) {
    %c0_i32 = arith.constant 0 : i32
    %c0_i32_0 = arith.constant 0 : i32
    return %arg1, %c0_i32 : i32, i32
  }
  func.func @transform_4(%arg0: i32, %arg1: i32) -> (i32, i32) {
    %c0_i32 = arith.constant 0 : i32
    %c0_i32_0 = arith.constant 0 : i32
    %c0_i32_1 = arith.constant 0 : i32
    return %c0_i32, %c0_i32_0 : i32, i32
  }
  func.func @transform_5(%arg0: i32, %arg1: i32) -> (i32, i32) {
    %c0_i32 = arith.constant 0 : i32
    %c0_i32_0 = arith.constant 0 : i32
    return %arg0, %c0_i32 : i32, i32
  }
}

</mosaic_0001>

<llo_original>
// kernel: tpu_custom_call.1
$region0: #{tpu_custom_call.1}
  #allocation0 [shape = 'u32[]', space=smem, size = 0x4, offset = 0x4, fixed_abs, tag = 'smem constant byte address 0x4 - core index']
  #allocation1 [shape = 'u32[144,128]{1,0:T(1,128)}', space=vmem, size = 0x12000, scoped, tag = 'internal scratch']
  #allocation2 [shape = 'f32[128,128]{1,0:T(8,128)}', space=vmem, size = 0x10000, scoped, tag = 'scratch operand']
  %s0 = inlined_call_operand.vmem [shape: f32[128,16], index: 0, kind: input, shape index: {}]
  %s1 = inlined_call_operand.vmem [shape: bf16[16,128], index: 1, kind: input, shape index: {}]
  %s2 = inlined_call_operand.vmem [shape: f32[1,128], index: 2, kind: input, shape index: {}]
  %s3 = inlined_call_operand.vmem [shape: bf16[128,128], index: 3, kind: input, shape index: {}]
  %s4 = inlined_call_operand.vmem [shape: f32[1,128], index: 4, kind: input, shape index: {}]
  %s5 = inlined_call_operand.hbm [shape: f32[128,128], index: 5, kind: output, shape index: {}]
  %s6 = sld [smem:[#allocation0]]
  $region38: #{tpu_custom_call.1} parent=0
    _
  %s8 = ssub.s32 1, %s6
  %s9 = scalar_select 0, %s8, %s6
  $region1: #{tpu_custom_call.1} parent=0
    #allocation3 [shape = 'u8[65536]{0}', space=vmem, size = 0x10000, scoped, tag = 'output window, operand 0, single buffered']
    #allocation4 [shape = 's32[1]{0}', space=sflag, size = 0x4, scoped, tag = 'scoped memory for tpu_custom_call.1']
    %10 = vsyncpa [#allocation4], 0
    // Predicated region
    $region2: #{tpu_custom_call.1} parent=1 // pred_check
      _
    $region3: #{tpu_custom_call.1} parent=1 // pred_check_branch
      %12 = sbr.rel (0) target = $region5
    $region4: #{tpu_custom_call.1} parent=1 // pred_region
      _
    $region5: #{tpu_custom_call.1} parent=1 // pred_fallthru
      _
    // Predicated region
    $region6: #{tpu_custom_call.1} parent=1 // pred_check
      _
    $region7: #{tpu_custom_call.1} parent=1 // pred_check_branch
      %14 = sbr.rel (0) target = $region9
    $region8: #{tpu_custom_call.1} parent=1 // pred_region
      _
    $region9: #{tpu_custom_call.1} parent=1 // pred_fallthru
      _
    // Predicated region
    $region10: #{tpu_custom_call.1} parent=1 // pred_check
      _
    $region11: #{tpu_custom_call.1} parent=1 // pred_check_branch
      %16 = sbr.rel (0) target = $region13
    $region12: #{tpu_custom_call.1} parent=1 // pred_region
      _
    $region13: #{tpu_custom_call.1} parent=1 // pred_fallthru
      _
    // Predicated region
    $region14: #{tpu_custom_call.1} parent=1 // pred_check
      _
    $region15: #{tpu_custom_call.1} parent=1 // pred_check_branch
      %18 = sbr.rel (0) target = $region17
    $region16: #{tpu_custom_call.1} parent=1 // pred_region
      _
    $region17: #{tpu_custom_call.1} parent=1 // pred_fallthru
      _
    // Predicated region
    $region18: #{tpu_custom_call.1} parent=1 // pred_check
      _
    $region19: #{tpu_custom_call.1} parent=1 // pred_check_branch
      %20 = sbr.rel (0) target = $region21
    $region20: #{tpu_custom_call.1} parent=1 // pred_region
      _
    $region21: #{tpu_custom_call.1} parent=1 // pred_fallthru
      _
    %p22 = scmp.eq.s32.totalorder 0, 0
    // Predicated region
    $region22: #{tpu_custom_call.1} parent=1 // pred_check
      %p23 = pneg %p22
    $region23: #{tpu_custom_call.1} parent=1 // pred_check_branch
      %25 = sbr.rel (%p23) target = $region25
    $region24: #{tpu_custom_call.1} parent=1 // pred_region
      %26 = vst [vmem:[#allocation2] sm:$0xff] 0.0
      %27 = vst [vmem:[#allocation2 + $0x8] sm:$0xff] 0.0
      %28 = vst [vmem:[#allocation2 + $0x10] sm:$0xff] 0.0
      %29 = vst [vmem:[#allocation2 + $0x18] sm:$0xff] 0.0
      %30 = vst [vmem:[#allocation2 + $0x20] sm:$0xff] 0.0
      %31 = vst [vmem:[#allocation2 + $0x28] sm:$0xff] 0.0
      %32 = vst [vmem:[#allocation2 + $0x30] sm:$0xff] 0.0
      %33 = vst [vmem:[#allocation2 + $0x38] sm:$0xff] 0.0
      %34 = vst [vmem:[#allocation2 + $0x40] sm:$0xff] 0.0
      %35 = vst [vmem:[#allocation2 + $0x48] sm:$0xff] 0.0
      %36 = vst [vmem:[#allocation2 + $0x50] sm:$0xff] 0.0
      %37 = vst [vmem:[#allocation2 + $0x58] sm:$0xff] 0.0
      %38 = vst [vmem:[#allocation2 + $0x60] sm:$0xff] 0.0
      %39 = vst [vmem:[#allocation2 + $0x68] sm:$0xff] 0.0
      %40 = vst [vmem:[#allocation2 + $0x70] sm:$0xff] 0.0
      %41 = vst [vmem:[#allocation2 + $0x78] sm:$0xff] 0.0
    $region25: #{tpu_custom_call.1} parent=1 // pred_fallthru
      _
    %v42 = vld [vmem:[%s0] sm:$0xff]
    %v43 = vld [vmem:[%s0 + $0x8] sm:$0xff]
    %v44 = vld [vmem:[%s0 + $0x10] sm:$0xff]
    %v45 = vld [vmem:[%s0 + $0x18] sm:$0xff]
    %v46 = vld [vmem:[%s0 + $0x20] sm:$0xff]
    %v47 = vld [vmem:[%s0 + $0x28] sm:$0xff]
    %v48 = vld [vmem:[%s0 + $0x30] sm:$0xff]
    %v49 = vld [vmem:[%s0 + $0x38] sm:$0xff]
    %v50 = vld [vmem:[%s0 + $0x40] sm:$0xff]
    %v51 = vld [vmem:[%s0 + $0x48] sm:$0xff]
    %v52 = vld [vmem:[%s0 + $0x50] sm:$0xff]
    %v53 = vld [vmem:[%s0 + $0x58] sm:$0xff]
    %v54 = vld [vmem:[%s0 + $0x60] sm:$0xff]
    %v55 = vld [vmem:[%s0 + $0x68] sm:$0xff]
    %v56 = vld [vmem:[%s0 + $0x70] sm:$0xff]
    %v57 = vld [vmem:[%s0 + $0x78] sm:$0xff]
    %v58 = vpack.c.bf16 %v43, %v42
    %v59 = vpack.c.bf16 %v45, %v44
    %v60 = vpack.c.bf16 %v47, %v46
    %v61 = vpack.c.bf16 %v49, %v48
    %v62 = vpack.c.bf16 %v51, %v50
    %v63 = vpack.c.bf16 %v53, %v52
    %v64 = vpack.c.bf16 %v55, %v54
    %v65 = vpack.c.bf16 %v57, %v56
    %v66 = vld [vmem:[%s1] sm:$0xf]
    %v67 = vld [vmem:[%s1 + $0x4] sm:$0xf]
    %v68 = vld [vmem:[%s2] sm:$0x1]
    %v70 = vlaneseq
    %v71 = vshrl.u32 %v70, 7
    %v72 = vsub.s32 0, %v71
    %v73 = vrot.slane %v68, %v72
    %v77 = vunpack.c.l.b16 %v66
    %v78 = vunpack.c.l.b16 %v67
    %v79 = vpack.c.b16 %v78, %v77
    %vm81 = vcmask 130048
    %v83 = vsel %vm81, %v58, 0
    %v86 = vsel %vm81, %v59, 0
    %v89 = vsel %vm81, %v60, 0
    %v92 = vsel %vm81, %v61, 0
    %v95 = vsel %vm81, %v62, 0
    %v98 = vsel %vm81, %v63, 0
    %v101 = vsel %vm81, %v64, 0
    %v104 = vsel %vm81, %v65, 0
    %106 = vmatprep.subr.bf16.mxu0 0
    %107 = vmatpush1.bf16.msra.mxu0 %v79
    %108 = vmatprep.subr.bf16.mxu0 0
    %109 = vmatpush1.bf16.msra.mxu0 0
    %110 = vmatprep.subr.bf16.mxu0 0
    %111 = vmatpush1.bf16.msra.mxu0 0
    %112 = vmatprep.subr.bf16.mxu0 0
    %113 = vmatpush1.bf16.msra.mxu0 0
    %114 = vmatprep.subr.bf16.mxu0 0
    %115 = vmatpush1.bf16.msra.mxu0 0
    %116 = vmatprep.subr.bf16.mxu0 0
    %117 = vmatpush1.bf16.msra.mxu0 0
    %118 = vmatprep.subr.bf16.mxu0 0
    %119 = vmatpush1.bf16.msra.mxu0 0
    %120 = vmatprep.subr.bf16.mxu0 0
    %121 = vmatpush1.bf16.msra.mxu0 0
    %122 = vmatprep.subr.bf16.mxu0 0
    %123 = vmatpush1.bf16.msra.mxu0 0
    %124 = vmatprep.subr.bf16.mxu0 0
    %125 = vmatpush1.bf16.msra.mxu0 0
    %126 = vmatprep.subr.bf16.mxu0 0
    %127 = vmatpush1.bf16.msra.mxu0 0
    %128 = vmatprep.subr.bf16.mxu0 0
    %129 = vmatpush1.bf16.msra.mxu0 0
    %130 = vmatprep.subr.bf16.mxu0 0
    %131 = vmatpush1.bf16.msra.mxu0 0
    %132 = vmatprep.subr.bf16.mxu0 0
    %133 = vmatpush1.bf16.msra.mxu0 0
    %134 = vmatprep.subr.bf16.mxu0 0
    %135 = vmatpush1.bf16.msra.mxu0 0
    %136 = vmatprep.subr.bf16.mxu0 0
    %137 = vmatpush1.bf16.msra.mxu0 0
    %138 = vmatprep.mubr.bf16.mxu0 0
    %139 = vmatmul.mubr.bf16.gmra.mrb[0].mxu0 %v83
    %v140 = vpop.f32.mrb[0].mxu0
    %v141 = vadd.f32 %v73, %v140
    %v142 = vpop.f32.mrb[0].mxu0
    %v143 = vpop.f32.mrb[0].mxu0
    %v144 = vadd.f32 %v73, %v143
    %v145 = vpop.f32.mrb[0].mxu0
    %146 = vmatprep.mubr.bf16.mxu0 0
    %147 = vmatmul.mubr.bf16.gmra.mrb[0].mxu0 %v86
    %v148 = vpop.f32.mrb[0].mxu0
    %v149 = vadd.f32 %v73, %v148
    %v150 = vpop.f32.mrb[0].mxu0
    %v151 = vpop.f32.mrb[0].mxu0
    %v152 = vadd.f32 %v73, %v151
    %v153 = vpop.f32.mrb[0].mxu0
    %154 = vmatprep.mubr.bf16.mxu0 0
    %155 = vmatmul.mubr.bf16.gmra.mrb[0].mxu0 %v89
    %v156 = vpop.f32.mrb[0].mxu0
    %v157 = vadd.f32 %v73, %v156
    %v158 = vpop.f32.mrb[0].mxu0
    %v159 = vpop.f32.mrb[0].mxu0
    %v160 = vadd.f32 %v73, %v159
    %v161 = vpop.f32.mrb[0].mxu0
    %162 = vmatprep.mubr.bf16.mxu0 0
    %163 = vmatmul.mubr.bf16.gmra.mrb[0].mxu0 %v92
    %v164 = vpop.f32.mrb[0].mxu0
    %v165 = vadd.f32 %v73, %v164
    %v166 = vpop.f32.mrb[0].mxu0
    %v167 = vpop.f32.mrb[0].mxu0
    %v168 = vadd.f32 %v73, %v167
    %v169 = vpop.f32.mrb[0].mxu0
    %170 = vmatprep.mubr.bf16.mxu0 0
    %171 = vmatmul.mubr.bf16.gmra.mrb[0].mxu0 %v95
    %v172 = vpop.f32.mrb[0].mxu0
    %v173 = vadd.f32 %v73, %v172
    %v174 = vpop.f32.mrb[0].mxu0
    %v175 = vpop.f32.mrb[0].mxu0
    %v176 = vadd.f32 %v73, %v175
    %v177 = vpop.f32.mrb[0].mxu0
    %178 = vmatprep.mubr.bf16.mxu0 0
    %179 = vmatmul.mubr.bf16.gmra.mrb[0].mxu0 %v98
    %v180 = vpop.f32.mrb[0].mxu0
    %v181 = vadd.f32 %v73, %v180
    %v182 = vpop.f32.mrb[0].mxu0
    %v183 = vpop.f32.mrb[0].mxu0
    %v184 = vadd.f32 %v73, %v183
    %v185 = vpop.f32.mrb[0].mxu0
    %186 = vmatprep.mubr.bf16.mxu0 0
    %187 = vmatmul.mubr.bf16.gmra.mrb[0].mxu0 %v101
    %v188 = vpop.f32.mrb[0].mxu0
    %v189 = vadd.f32 %v73, %v188
    %v190 = vpop.f32.mrb[0].mxu0
    %v191 = vpop.f32.mrb[0].mxu0
    %v192 = vadd.f32 %v73, %v191
    %v193 = vpop.f32.mrb[0].mxu0
    %194 = vmatprep.mubr.bf16.mxu0 0
    %195 = vmatmul.mubr.bf16.gmra.mrb[0].mxu0 %v104
    %v196 = vpop.f32.mrb[0].mxu0
    %v197 = vadd.f32 %v73, %v196
    %v198 = vpop.f32.mrb[0].mxu0
    %v199 = vpop.f32.mrb[0].mxu0
    %v200 = vadd.f32 %v73, %v199
    %v201 = vpop.f32.mrb[0].mxu0
    %202 = vdwg.mxu0
    %v203 = vmax.f32 %v141, 0.0
    %v204 = vmax.f32 %v144, 0.0
    %v205 = vmax.f32 %v149, 0.0
    %v206 = vmax.f32 %v152, 0.0
    %v207 = vmax.f32 %v157, 0.0
    %v208 = vmax.f32 %v160, 0.0
    %v209 = vmax.f32 %v165, 0.0
    %v210 = vmax.f32 %v168, 0.0
    %v211 = vmax.f32 %v173, 0.0
    %v212 = vmax.f32 %v176, 0.0
    %v213 = vmax.f32 %v181, 0.0
    %v214 = vmax.f32 %v184, 0.0
    %v215 = vmax.f32 %v189, 0.0
    %v216 = vmax.f32 %v192, 0.0
    %v217 = vmax.f32 %v197, 0.0
    %v218 = vmax.f32 %v200, 0.0
    %v219 = vpack.c.bf16 %v204, %v203
    %v220 = vpack.c.bf16 %v206, %v205
    %v221 = vpack.c.bf16 %v208, %v207
    %v222 = vpack.c.bf16 %v210, %v209
    %v223 = vpack.c.bf16 %v212, %v211
    %v224 = vpack.c.bf16 %v214, %v213
    %v225 = vpack.c.bf16 %v216, %v215
    %v226 = vpack.c.bf16 %v218, %v217
    %v227 = vld [vmem:[#allocation2] sm:$0xff]
    %v228 = vld [vmem:[#allocation2 + $0x8] sm:$0xff]
    %v229 = vld [vmem:[#allocation2 + $0x10] sm:$0xff]
    %v230 = vld [vmem:[#allocation2 + $0x18] sm:$0xff]
    %v231 = vld [vmem:[#allocation2 + $0x20] sm:$0xff]
    %v232 = vld [vmem:[#allocation2 + $0x28] sm:$0xff]
    %v233 = vld [vmem:[#allocation2 + $0x30] sm:$0xff]
    %v234 = vld [vmem:[#allocation2 + $0x38] sm:$0xff]
    %v235 = vld [vmem:[#allocation2 + $0x40] sm:$0xff]
    %v236 = vld [vmem:[#allocation2 + $0x48] sm:$0xff]
    %v237 = vld [vmem:[#allocation2 + $0x50] sm:$0xff]
    %v238 = vld [vmem:[#allocation2 + $0x58] sm:$0xff]
    %v239 = vld [vmem:[#allocation2 + $0x60] sm:$0xff]
    %v240 = vld [vmem:[#allocation2 + $0x68] sm:$0xff]
    %v241 = vld [vmem:[#allocation2 + $0x70] sm:$0xff]
    %v242 = vld [vmem:[#allocation2 + $0x78] sm:$0xff]
    %v243 = vld [vmem:[%s3] sm:$0xf]
    %v244 = vld [vmem:[%s3 + $0x4] sm:$0xf]
    %v245 = vld [vmem:[%s3 + $0x8] sm:$0xf]
    %v246 = vld [vmem:[%s3 + $0xc] sm:$0xf]
    %v247 = vld [vmem:[%s3 + $0x10] sm:$0xf]
    %v248 = vld [vmem:[%s3 + $0x14] sm:$0xf]
    %v249 = vld [vmem:[%s3 + $0x18] sm:$0xf]
    %v250 = vld [vmem:[%s3 + $0x1c] sm:$0xf]
    %v251 = vld [vmem:[%s3 + $0x20] sm:$0xf]
    %v252 = vld [vmem:[%s3 + $0x24] sm:$0xf]
    %v253 = vld [vmem:[%s3 + $0x28] sm:$0xf]
    %v254 = vld [vmem:[%s3 + $0x2c] sm:$0xf]
    %v255 = vld [vmem:[%s3 + $0x30] sm:$0xf]
    %v256 = vld [vmem:[%s3 + $0x34] sm:$0xf]
    %v257 = vld [vmem:[%s3 + $0x38] sm:$0xf]
    %v258 = vld [vmem:[%s3 + $0x3c] sm:$0xf]
    %v275 = vunpack.c.l.b16 %v243
    %v276 = vunpack.c.l.b16 %v244
    %v277 = vunpack.c.l.b16 %v245
    %v278 = vunpack.c.l.b16 %v246
    %v279 = vunpack.c.l.b16 %v247
    %v280 = vunpack.c.l.b16 %v248
    %v281 = vunpack.c.l.b16 %v249
    %v282 = vunpack.c.l.b16 %v250
    %v283 = vunpack.c.l.b16 %v251
    %v284 = vunpack.c.l.b16 %v252
    %v285 = vunpack.c.l.b16 %v253
    %v286 = vunpack.c.l.b16 %v254
    %v287 = vunpack.c.l.b16 %v255
    %v288 = vunpack.c.l.b16 %v256
    %v289 = vunpack.c.l.b16 %v257
    %v290 = vunpack.c.l.b16 %v258
    %v291 = vpack.c.b16 %v276, %v275
    %v292 = vpack.c.b16 %v278, %v277
    %v293 = vpack.c.b16 %v280, %v279
    %v294 = vpack.c.b16 %v282, %v281
    %v295 = vpack.c.b16 %v284, %v283
    %v296 = vpack.c.b16 %v286, %v285
    %v297 = vpack.c.b16 %v288, %v287
    %v298 = vpack.c.b16 %v290, %v289
    %307 = vmatprep.subr.bf16.mxu0 0
    %308 = vmatpush1.bf16.msra.mxu0 %v291
    %309 = vmatprep.subr.bf16.mxu0 0
    %310 = vmatpush1.bf16.msra.mxu0 %v292
    %311 = vmatprep.subr.bf16.mxu0 0
    %312 = vmatpush1.bf16.msra.mxu0 %v293
    %313 = vmatprep.subr.bf16.mxu0 0
    %314 = vmatpush1.bf16.msra.mxu0 %v294
    %315 = vmatprep.subr.bf16.mxu0 0
    %316 = vmatpush1.bf16.msra.mxu0 %v295
    %317 = vmatprep.subr.bf16.mxu0 0
    %318 = vmatpush1.bf16.msra.mxu0 %v296
    %319 = vmatprep.subr.bf16.mxu0 0
    %320 = vmatpush1.bf16.msra.mxu0 %v297
    %321 = vmatprep.subr.bf16.mxu0 0
    %322 = vmatpush1.bf16.msra.mxu0 %v298
    %323 = vmatprep.subr.bf16.mxu0 0
    %324 = vmatpush1.bf16.msra.mxu0 0
    %325 = vmatprep.subr.bf16.mxu0 0
    %326 = vmatpush1.bf16.msra.mxu0 0
    %327 = vmatprep.subr.bf16.mxu0 0
    %328 = vmatpush1.bf16.msra.mxu0 0
    %329 = vmatprep.subr.bf16.mxu0 0
    %330 = vmatpush1.bf16.msra.mxu0 0
    %331 = vmatprep.subr.bf16.mxu0 0
    %332 = vmatpush1.bf16.msra.mxu0 0
    %333 = vmatprep.subr.bf16.mxu0 0
    %334 = vmatpush1.bf16.msra.mxu0 0
    %335 = vmatprep.subr.bf16.mxu0 0
    %336 = vmatpush1.bf16.msra.mxu0 0
    %337 = vmatprep.subr.bf16.mxu0 0
    %338 = vmatpush1.bf16.msra.mxu0 0
    %339 = vmatprep.mubr.bf16.mxu0 0
    %340 = vmatmul.mubr.bf16.gmra.mrb[0].mxu0 %v219
    %v341 = vpop.f32.mrb[0].mxu0
    %v342 = vadd.f32 0.0, %v341
    %v343 = vpop.f32.mrb[0].mxu0
    %v344 = vpop.f32.mrb[0].mxu0
    %v345 = vadd.f32 0.0, %v344
    %v346 = vpop.f32.mrb[0].mxu0
    %347 = vmatprep.mubr.bf16.mxu0 0
    %348 = vmatmul.mubr.bf16.gmra.mrb[0].mxu0 %v220
    %v349 = vpop.f32.mrb[0].mxu0
    %v350 = vadd.f32 0.0, %v349
    %v351 = vpop.f32.mrb[0].mxu0
    %v352 = vpop.f32.mrb[0].mxu0
    %v353 = vadd.f32 0.0, %v352
    %v354 = vpop.f32.mrb[0].mxu0
    %355 = vmatprep.mubr.bf16.mxu0 0
    %356 = vmatmul.mubr.bf16.gmra.mrb[0].mxu0 %v221
    %v357 = vpop.f32.mrb[0].mxu0
    %v358 = vadd.f32 0.0, %v357
    %v359 = vpop.f32.mrb[0].mxu0
    %v360 = vpop.f32.mrb[0].mxu0
    %v361 = vadd.f32 0.0, %v360
    %v362 = vpop.f32.mrb[0].mxu0
    %363 = vmatprep.mubr.bf16.mxu0 0
    %364 = vmatmul.mubr.bf16.gmra.mrb[0].mxu0 %v222
    %v365 = vpop.f32.mrb[0].mxu0
    %v366 = vadd.f32 0.0, %v365
    %v367 = vpop.f32.mrb[0].mxu0
    %v368 = vpop.f32.mrb[0].mxu0
    %v369 = vadd.f32 0.0, %v368
    %v370 = vpop.f32.mrb[0].mxu0
    %371 = vmatprep.mubr.bf16.mxu0 0
    %372 = vmatmul.mubr.bf16.gmra.mrb[0].mxu0 %v223
    %v373 = vpop.f32.mrb[0].mxu0
    %v374 = vadd.f32 0.0, %v373
    %v375 = vpop.f32.mrb[0].mxu0
    %v376 = vpop.f32.mrb[0].mxu0
    %v377 = vadd.f32 0.0, %v376
    %v378 = vpop.f32.mrb[0].mxu0
    %379 = vmatprep.mubr.bf16.mxu0 0
    %380 = vmatmul.mubr.bf16.gmra.mrb[0].mxu0 %v224
    %v381 = vpop.f32.mrb[0].mxu0
    %v382 = vadd.f32 0.0, %v381
    %v383 = vpop.f32.mrb[0].mxu0
    %v384 = vpop.f32.mrb[0].mxu0
    %v385 = vadd.f32 0.0, %v384
    %v386 = vpop.f32.mrb[0].mxu0
    %387 = vmatprep.mubr.bf16.mxu0 0
    %388 = vmatmul.mubr.bf16.gmra.mrb[0].mxu0 %v225
    %v389 = vpop.f32.mrb[0].mxu0
    %v390 = vadd.f32 0.0, %v389
    %v391 = vpop.f32.mrb[0].mxu0
    %v392 = vpop.f32.mrb[0].mxu0
    %v393 = vadd.f32 0.0, %v392
    %v394 = vpop.f32.mrb[0].mxu0
    %395 = vmatprep.mubr.bf16.mxu0 0
    %396 = vmatmul.mubr.bf16.gmra.mrb[0].mxu0 %v226
    %v397 = vpop.f32.mrb[0].mxu0
    %v398 = vadd.f32 0.0, %v397
    %v399 = vpop.f32.mrb[0].mxu0
    %v400 = vpop.f32.mrb[0].mxu0
    %v401 = vadd.f32 0.0, %v400
    %v402 = vpop.f32.mrb[0].mxu0
    %403 = vdwg.mxu0
    %v404 = vadd.f32 %v227, %v342
    %v405 = vadd.f32 %v228, %v345
    %v406 = vadd.f32 %v229, %v350
    %v407 = vadd.f32 %v230, %v353
    %v408 = vadd.f32 %v231, %v358
    %v409 = vadd.f32 %v232, %v361
    %v410 = vadd.f32 %v233, %v366
    %v411 = vadd.f32 %v234, %v369
    %v412 = vadd.f32 %v235, %v374
    %v413 = vadd.f32 %v236, %v377
    %v414 = vadd.f32 %v237, %v382
    %v415 = vadd.f32 %v238, %v385
    %v416 = vadd.f32 %v239, %v390
    %v417 = vadd.f32 %v240, %v393
    %v418 = vadd.f32 %v241, %v398
    %v419 = vadd.f32 %v242, %v401
    %420 = vst [vmem:[#allocation2] sm:$0xff] %v404
    %421 = vst [vmem:[#allocation2 + $0x8] sm:$0xff] %v405
    %422 = vst [vmem:[#allocation2 + $0x10] sm:$0xff] %v406
    %423 = vst [vmem:[#allocation2 + $0x18] sm:$0xff] %v407
    %424 = vst [vmem:[#allocation2 + $0x20] sm:$0xff] %v408
    %425 = vst [vmem:[#allocation2 + $0x28] sm:$0xff] %v409
    %426 = vst [vmem:[#allocation2 + $0x30] sm:$0xff] %v410
    %427 = vst [vmem:[#allocation2 + $0x38] sm:$0xff] %v411
    %428 = vst [vmem:[#allocation2 + $0x40] sm:$0xff] %v412
    %429 = vst [vmem:[#allocation2 + $0x48] sm:$0xff] %v413
    %430 = vst [vmem:[#allocation2 + $0x50] sm:$0xff] %v414
    %431 = vst [vmem:[#allocation2 + $0x58] sm:$0xff] %v415
    %432 = vst [vmem:[#allocation2 + $0x60] sm:$0xff] %v416
    %433 = vst [vmem:[#allocation2 + $0x68] sm:$0xff] %v417
    %434 = vst [vmem:[#allocation2 + $0x70] sm:$0xff] %v418
    %435 = vst [vmem:[#allocation2 + $0x78] sm:$0xff] %v419
    // Predicated region
    $region26: #{tpu_custom_call.1} parent=1 // pred_check
      %p436 = pneg %p22
    $region27: #{tpu_custom_call.1} parent=1 // pred_check_branch
      %438 = sbr.rel (%p436) target = $region29
    $region28: #{tpu_custom_call.1} parent=1 // pred_region
      %v439 = vld [vmem:[#allocation2] sm:$0xff]
      %v440 = vld [vmem:[#allocation2 + $0x8] sm:$0xff]
      %v441 = vld [vmem:[#allocation2 + $0x10] sm:$0xff]
      %v442 = vld [vmem:[#allocation2 + $0x18] sm:$0xff]
      %v443 = vld [vmem:[#allocation2 + $0x20] sm:$0xff]
      %v444 = vld [vmem:[#allocation2 + $0x28] sm:$0xff]
      %v445 = vld [vmem:[#allocation2 + $0x30] sm:$0xff]
      %v446 = vld [vmem:[#allocation2 + $0x38] sm:$0xff]
      %v447 = vld [vmem:[#allocation2 + $0x40] sm:$0xff]
      %v448 = vld [vmem:[#allocation2 + $0x48] sm:$0xff]
      %v449 = vld [vmem:[#allocation2 + $0x50] sm:$0xff]
      %v450 = vld [vmem:[#allocation2 + $0x58] sm:$0xff]
      %v451 = vld [vmem:[#allocation2 + $0x60] sm:$0xff]
      %v452 = vld [vmem:[#allocation2 + $0x68] sm:$0xff]
      %v453 = vld [vmem:[#allocation2 + $0x70] sm:$0xff]
      %v454 = vld [vmem:[#allocation2 + $0x78] sm:$0xff]
      %v455 = vld [vmem:[%s4] sm:$0x1]
      %v457 = vlaneseq
      %v458 = vshrl.u32 %v457, 7
      %v459 = vsub.s32 0, %v458
      %v460 = vrot.slane %v455, %v459
      %v462 = vadd.f32 %v439, %v460
      %v463 = vadd.f32 %v440, %v460
      %v464 = vadd.f32 %v441, %v460
      %v465 = vadd.f32 %v442, %v460
      %v466 = vadd.f32 %v443, %v460
      %v467 = vadd.f32 %v444, %v460
      %v468 = vadd.f32 %v445, %v460
      %v469 = vadd.f32 %v446, %v460
      %v470 = vadd.f32 %v447, %v460
      %v471 = vadd.f32 %v448, %v460
      %v472 = vadd.f32 %v449, %v460
      %v473 = vadd.f32 %v450, %v460
      %v474 = vadd.f32 %v451, %v460
      %v475 = vadd.f32 %v452, %v460
      %v476 = vadd.f32 %v453, %v460
      %v477 = vadd.f32 %v454, %v460
      %v478 = vmax.f32 %v462, 0.0
      %v479 = vmax.f32 %v463, 0.0
      %v480 = vmax.f32 %v464, 0.0
      %v481 = vmax.f32 %v465, 0.0
      %v482 = vmax.f32 %v466, 0.0
      %v483 = vmax.f32 %v467, 0.0
      %v484 = vmax.f32 %v468, 0.0
      %v485 = vmax.f32 %v469, 0.0
      %v486 = vmax.f32 %v470, 0.0
      %v487 = vmax.f32 %v471, 0.0
      %v488 = vmax.f32 %v472, 0.0
      %v489 = vmax.f32 %v473, 0.0
      %v490 = vmax.f32 %v474, 0.0
      %v491 = vmax.f32 %v475, 0.0
      %v492 = vmax.f32 %v476, 0.0
      %v493 = vmax.f32 %v477, 0.0
      %494 = vst [vmem:[#allocation3] sm:$0xff] %v478
      %495 = vst [vmem:[#allocation3 + $0x8] sm:$0xff] %v479
      %496 = vst [vmem:[#allocation3 + $0x10] sm:$0xff] %v480
      %497 = vst [vmem:[#allocation3 + $0x18] sm:$0xff] %v481
      %498 = vst [vmem:[#allocation3 + $0x20] sm:$0xff] %v482
      %499 = vst [vmem:[#allocation3 + $0x28] sm:$0xff] %v483
      %500 = vst [vmem:[#allocation3 + $0x30] sm:$0xff] %v484
      %501 = vst [vmem:[#allocation3 + $0x38] sm:$0xff] %v485
      %502 = vst [vmem:[#allocation3 + $0x40] sm:$0xff] %v486
      %503 = vst [vmem:[#allocation3 + $0x48] sm:$0xff] %v487
      %504 = vst [vmem:[#allocation3 + $0x50] sm:$0xff] %v488
      %505 = vst [vmem:[#allocation3 + $0x58] sm:$0xff] %v489
      %506 = vst [vmem:[#allocation3 + $0x60] sm:$0xff] %v490
      %507 = vst [vmem:[#allocation3 + $0x68] sm:$0xff] %v491
      %508 = vst [vmem:[#allocation3 + $0x70] sm:$0xff] %v492
      %509 = vst [vmem:[#allocation3 + $0x78] sm:$0xff] %v493
    $region29: #{tpu_custom_call.1} parent=1 // pred_fallthru
      _
    // Predicated region
    $region30: #{tpu_custom_call.1} parent=1 // pred_check
      _
    $region31: #{tpu_custom_call.1} parent=1 // pred_check_branch
      %511 = sbr.rel (0) target = $region33
    $region32: #{tpu_custom_call.1} parent=1 // pred_region
      %s513 = ssub.s32 2048, 2048
      %514 = vsyncadd [#allocation4], %s513
      %s515 = sshll.u32 [#allocation3], 4
      %s516 = int_to_ptr.vmem [resolvable:$true] %s515
      %521 = dma.vmem_to_hbm [thread:$0]  %s516, 2048, %s5, [#allocation4], 128, 128, 8
    $region33: #{tpu_custom_call.1} parent=1 // pred_fallthru
      _
    // Predicated region
    $region34: #{tpu_custom_call.1} parent=1 // pred_check
      _
    $region35: #{tpu_custom_call.1} parent=1 // pred_check_branch
      %523 = sbr.rel (0) target = $region37
    $region36: #{tpu_custom_call.1} parent=1 // pred_region
      %524 = dma.done [#allocation4], 2048
    $region37: #{tpu_custom_call.1} parent=1 // pred_fallthru
      _
    %525 = vsyncpa [#allocation4], 1

</llo_original>
